<compile_context>
chip_gen: v6e
topology: v6e:2x2x1
jax: 0.10.0
libtpu: 0.0.40
codegen_flags: <defaults>
</compile_context>

<pallas_src>
import math

import jax
import jax.numpy as jnp
from jax.experimental import pallas as pl
from jax.experimental.pallas import tpu as pltpu


def affine_kernel(x_ref, a_ref, b_ref, o_ref):
    # x_ref/o_ref: (tr, L) tile; a_ref/b_ref: (ga, L) f32 channel pattern.
    x = x_ref[...].astype(jnp.float32)
    a = a_ref[...]
    b = b_ref[...]
    ga = a.shape[0]
    if ga == 1:
        y = x * a + b                                  # sublane broadcast
    else:
        tr, L = x.shape
        # ga is a multiple of the sublane packing, so this reshape splits the
        # sublane axis on tile boundaries (layout-cheap).
        y = (x.reshape(tr // ga, ga, L) * a[None, :, :] + b[None, :, :]).reshape(tr, L)
    o_ref[...] = y.astype(o_ref.dtype)


def affine(x, alpha, beta, *, target_block_bytes=4 * 1024 * 1024):
    """y = alpha * x + beta, alpha/beta shape (D,), x shape (..., D).

    Output dtype follows x; math is done in f32 and rounded once on store.
    """
    orig_shape = x.shape
    D = orig_shape[-1]
    assert alpha.shape == (D,) and beta.shape == (D,)

    # Keep params in f32 (tiny DMA); avoids double rounding for bf16 x.
    alpha = alpha.astype(jnp.float32)
    beta = beta.astype(jnp.float32)

    total = math.prod(orig_shape)
    itemsize = jnp.dtype(x.dtype).itemsize
    sub = max(8, 32 // itemsize)          # sublane packing: 8 f32 / 16 bf16 / 32 i8

    # ---- Lane-dense layout selection -------------------------------------
    if D % 128 == 0:
        # Channel axis is already lane-dense.
        L, ga = D, 1
        a2 = alpha.reshape(1, D)
        b2 = beta.reshape(1, D)
    elif total % 128 == 0:
        # View the flat tensor as (R, 128). alpha[(r*128 + l) % D] repeats with
        # period g = lcm(D,128)/128 rows; pad the pattern to the sublane packing.
        L = 128
        g = math.lcm(D, 128) // 128
        ga = 1 if g == 1 else math.lcm(g, sub)
        a2 = jnp.tile(alpha, (ga * 128) // D).reshape(ga, 128)
        b2 = jnp.tile(beta, (ga * 128) // D).reshape(ga, 128)
    else:
        # TODO(synk): rare ragged case (total % 128 != 0) falls back to masked
        # partial stores; still correct, just slower.
        L, ga = D, 1
        a2 = alpha.reshape(1, D)
        b2 = beta.reshape(1, D)

    R = total // L
    x2 = x.reshape(R, L)

    # ---- Row tile sizing (~target_block_bytes, aligned to pattern/sublanes) --
    step = ga if ga > 1 else sub          # ga > 1 is already a multiple of sub
    tr = max(step, (target_block_bytes // (L * itemsize)) // step * step)
    tr = min(tr, pl.cdiv(R, step) * step)
    num_blocks = pl.cdiv(R, tr)

    block_bytes = tr * L * itemsize
    # 2 in-buffers + 2 out-buffers (double-buffered) + params + headroom.
    vmem_limit = int(max(32 * 1024 * 1024, 4 * block_bytes + 4 * 1024 * 1024))

    out2 = pl.pallas_call(
        affine_kernel,
        out_shape=jax.ShapeDtypeStruct((R, L), x.dtype),
        grid=(num_blocks,),
        in_specs=[
            pl.BlockSpec((tr, L), lambda i: (i, 0)),
            pl.BlockSpec((ga, L), lambda i: (0, 0)),
            pl.BlockSpec((ga, L), lambda i: (0, 0)),
        ],
        out_specs=pl.BlockSpec((tr, L), lambda i: (i, 0)),
        compiler_params=pltpu.CompilerParams(
            dimension_semantics=("parallel",),
            vmem_limit_bytes=vmem_limit,
        ),
    )(x2, a2, b2)

    return out2.reshape(orig_shape)


if __name__ == "__main__":
    key = jax.random.PRNGKey(0)
    keys = jax.random.split(key, 12)

    def ref_affine(x, alpha, beta):
        y = alpha.astype(jnp.float32) * x.astype(jnp.float32) + beta.astype(jnp.float32)
        return y.astype(x.dtype)

    # Test 1: small ResMLP-style shape, D < 128 (lane repacking, g == 1).
    B, N, D = 2, 8, 32
    x = jax.random.normal(keys[0], (B, N, D), dtype=jnp.float32)
    alpha = jnp.ones((D,), jnp.float32) + 0.1 * jax.random.normal(keys[1], (D,), jnp.float32)
    beta = 0.1 * jax.random.normal(keys[2], (D,), jnp.float32)
    y = jax.block_until_ready(affine(x, alpha, beta))
    assert y.shape == x.shape and y.dtype == x.dtype
    assert jnp.allclose(y, ref_affine(x, alpha, beta), atol=1e-6, rtol=1e-6), "f32 D=32"

    # Test 2: bf16 input, D multiple of 128, ragged row count (boundary clamp).
    B2, N2, D2 = 3, 7, 256
    x2 = jax.random.normal(keys[3], (B2, N2, D2), dtype=jnp.bfloat16)
    alpha2 = jnp.ones((D2,), jnp.float32) + 0.1 * jax.random.normal(keys[4], (D2,), jnp.float32)
    beta2 = 0.1 * jax.random.normal(keys[5], (D2,), jnp.float32)
    y2 = jax.block_until_ready(affine(x2, alpha2, beta2))
    assert y2.shape == x2.shape and y2.dtype == x2.dtype
    assert jnp.allclose(y2.astype(jnp.float32), ref_affine(x2, alpha2, beta2).astype(jnp.float32),
                        atol=2e-2, rtol=2e-2), "bf16 D=256"

    # Test 3: D not dividing / not divided by 128 (general lcm repack, ga > 1).
    B3, N3, D3 = 2, 16, 96
    x3 = jax.random.normal(keys[6], (B3, N3, D3), dtype=jnp.float32)
    alpha3 = jnp.ones((D3,), jnp.float32) + 0.1 * jax.random.normal(keys[7], (D3,), jnp.float32)
    beta3 = 0.1 * jax.random.normal(keys[8], (D3,), jnp.float32)
    y3 = jax.block_until_ready(affine(x3, alpha3, beta3))
    assert y3.shape == x3.shape and y3.dtype == x3.dtype
    assert jnp.allclose(y3, ref_affine(x3, alpha3, beta3), atol=1e-6, rtol=1e-6), "f32 D=96"

    # Test 4: multi-block ragged grid (forced small blocks), D < 128.
    B4, N4, D4 = 2, 197, 64
    x4 = jax.random.normal(keys[9], (B4, N4, D4), dtype=jnp.float32)
    alpha4 = jnp.ones((D4,), jnp.float32) + 0.1 * jax.random.normal(keys[10], (D4,), jnp.float32)
    beta4 = 0.1 * jax.random.normal(keys[11], (D4,), jnp.float32)
    y4 = jax.block_until_ready(affine(x4, alpha4, beta4, target_block_bytes=64 * 1024))
    assert y4.shape == x4.shape and y4.dtype == x4.dtype
    assert jnp.allclose(y4, ref_affine(x4, alpha4, beta4), atol=1e-6, rtol=1e-6), "f32 D=64 ragged"

    print("KERNEL_OK")
</pallas_src>

<mosaic_0001>
module attributes {stable_mosaic.version = 11 : i64} {
  func.func @affine_kernel(%arg0: i32, %arg1: memref<8x128xf32, #tpu.memory_space<vmem>>, %arg2: memref<1x128xf32, #tpu.memory_space<vmem>>, %arg3: memref<1x128xf32, #tpu.memory_space<vmem>>, %arg4: memref<8x128xf32, #tpu.memory_space<vmem>>) attributes {dimension_semantics = [#tpu.dimension_semantics<parallel>], iteration_bounds = array<i64: 1>, scalar_prefetch = 0 : i64, scratch_operands = 0 : i64, tpu.core_type = #tpu.core_type<tc>, window_params = [{transform_indices = @transform_0, window_bounds = array<i64: 8, 128>}, {pipeline_mode = #tpu.pipeline_mode<synchronous>, transform_indices = @transform_1, window_bounds = array<i64: 1, 128>}, {pipeline_mode = #tpu.pipeline_mode<synchronous>, transform_indices = @transform_2, window_bounds = array<i64: 1, 128>}, {transform_indices = @transform_3, window_bounds = array<i64: 8, 128>}]} {
    %c0 = arith.constant 0 : index
    %c0_0 = arith.constant 0 : index
    %0 = vector.load %arg1[%c0, %c0_0] : memref<8x128xf32, #tpu.memory_space<vmem>>, vector<8x128xf32>
    %c0_1 = arith.constant 0 : index
    %c0_2 = arith.constant 0 : index
    %1 = vector.load %arg2[%c0_1, %c0_2] : memref<1x128xf32, #tpu.memory_space<vmem>>, vector<1x128xf32>
    %c0_3 = arith.constant 0 : index
    %c0_4 = arith.constant 0 : index
    %2 = vector.load %arg3[%c0_3, %c0_4] : memref<1x128xf32, #tpu.memory_space<vmem>>, vector<1x128xf32>
    %3 = vector.broadcast %1 : vector<1x128xf32> to vector<8x128xf32>
    %4 = arith.mulf %0, %3 : vector<8x128xf32>
    %5 = vector.broadcast %2 : vector<1x128xf32> to vector<8x128xf32>
    %6 = arith.addf %4, %5 : vector<8x128xf32>
    %c0_5 = arith.constant 0 : index
    %c0_6 = arith.constant 0 : index
    %7 = vector.load %arg4[%c0_5, %c0_6] : memref<8x128xf32, #tpu.memory_space<vmem>>, vector<8x128xf32>
    tpu.vector_store %arg4[%c0_5, %c0_6], %6 {strides = array<i32>} : memref<8x128xf32, #tpu.memory_space<vmem>>, vector<8x128xf32>,
    return
  }
  func.func @transform_0(%arg0: i32) -> (i32, i32) {
    %c0_i32 = arith.constant 0 : i32
    %c0_i32_0 = arith.constant 0 : i32
    return %arg0, %c0_i32 : i32, i32
  }
  func.func @transform_1(%arg0: i32) -> (i32, i32) {
    %c0_i32 = arith.constant 0 : i32
    %c0_i32_0 = arith.constant 0 : i32
    %c0_i32_1 = arith.constant 0 : i32
    return %c0_i32, %c0_i32_0 : i32, i32
  }
  func.func @transform_2(%arg0: i32) -> (i32, i32) {
    %c0_i32 = arith.constant 0 : i32
    %c0_i32_0 = arith.constant 0 : i32
    %c0_i32_1 = arith.constant 0 : i32
    return %c0_i32, %c0_i32_0 : i32, i32
  }
  func.func @transform_3(%arg0: i32) -> (i32, i32) {
    %c0_i32 = arith.constant 0 : i32
    %c0_i32_0 = arith.constant 0 : i32
    return %arg0, %c0_i32 : i32, i32
  }
}

</mosaic_0001>

<llo_original>
// kernel: tpu_custom_call.1
$region0: #{tpu_custom_call.1}
  #allocation0 [shape = 'u32[]', space=smem, size = 0x4, offset = 0x4, fixed_abs, tag = 'smem constant byte address 0x4 - core index']
  #allocation1 [shape = 'u32[144,128]{1,0:T(1,128)}', space=vmem, size = 0x12000, scoped, tag = 'internal scratch']
  %s0 = inlined_call_operand.hbm [shape: f32[4,128], index: 0, kind: input, shape index: {}]
  %s1 = inlined_call_operand.vmem [shape: f32[1,128], index: 1, kind: input, shape index: {}]
  %s2 = inlined_call_operand.vmem [shape: f32[1,128], index: 2, kind: input, shape index: {}]
  %s3 = inlined_call_operand.hbm [shape: f32[4,128], index: 3, kind: output, shape index: {}]
  %s4 = sld [smem:[#allocation0]]
  $region26: #{tpu_custom_call.1} parent=0
    _
  %s6 = ssub.s32 1, %s4
  %s7 = scalar_select 0, %s6, %s4
  $region1: #{tpu_custom_call.1} parent=0
    #allocation2 [shape = 'u8[4096]{0}', space=vmem, size = 0x1000, scoped, tag = 'input window, operand 0, single buffered']
    #allocation3 [shape = 's32[1]{0}', space=sflag, size = 0x4, scoped, tag = 'scoped memory for tpu_custom_call.1']
    #allocation4 [shape = 's32[1]{0}', space=sflag, size = 0x4, scoped, tag = 'scoped memory for tpu_custom_call.1']
    #allocation5 [shape = 'u8[4096]{0}', space=vmem, size = 0x1000, scoped, tag = 'output window, operand 0, single buffered']
    %8 = vsyncpa [#allocation3], 0
    %9 = vsyncpa [#allocation4], 0
    // Predicated region
    $region2: #{tpu_custom_call.1} parent=1 // pred_check
      _
    $region3: #{tpu_custom_call.1} parent=1 // pred_check_branch
      %11 = sbr.rel (0) target = $region5
    $region4: #{tpu_custom_call.1} parent=1 // pred_region
      %s13 = ssub.s32 128, 64
      %14 = vsyncadd [#allocation3], %s13
      %s15 = sshll.u32 [#allocation2], 4
      %s16 = int_to_ptr.vmem [resolvable:$true] %s15
      %21 = dma.hbm_to_vmem [thread:$0]  %s0, 64, %s16, [#allocation3], 64, 64, 4
    $region5: #{tpu_custom_call.1} parent=1 // pred_fallthru
      _
    // Predicated region
    $region6: #{tpu_custom_call.1} parent=1 // pred_check
      _
    $region7: #{tpu_custom_call.1} parent=1 // pred_check_branch
      %23 = sbr.rel (0) target = $region9
    $region8: #{tpu_custom_call.1} parent=1 // pred_region
      _
    $region9: #{tpu_custom_call.1} parent=1 // pred_fallthru
      _
    // Predicated region
    $region10: #{tpu_custom_call.1} parent=1 // pred_check
      _
    $region11: #{tpu_custom_call.1} parent=1 // pred_check_branch
      %25 = sbr.rel (0) target = $region13
    $region12: #{tpu_custom_call.1} parent=1 // pred_region
      _
    $region13: #{tpu_custom_call.1} parent=1 // pred_fallthru
      _
    // Predicated region
    $region14: #{tpu_custom_call.1} parent=1 // pred_check
      _
    $region15: #{tpu_custom_call.1} parent=1 // pred_check_branch
      %27 = sbr.rel (0) target = $region17
    $region16: #{tpu_custom_call.1} parent=1 // pred_region
      %28 = dma.done [#allocation3], 128
    $region17: #{tpu_custom_call.1} parent=1 // pred_fallthru
      _
    %v29 = vld [vmem:[#allocation2] sm:$0xff]
    %v30 = vld [vmem:[%s1] sm:$0x1]
    %v31 = vld [vmem:[%s2] sm:$0x1]
    %v33 = vlaneseq
    %v34 = vshrl.u32 %v33, 7
    %v35 = vsub.s32 0, %v34
    %v36 = vrot.slane %v30, %v35
    %v38 = vmul.f32 %v29, %v36
    %v40 = vlaneseq
    %v41 = vshrl.u32 %v40, 7
    %v42 = vsub.s32 0, %v41
    %v43 = vrot.slane %v31, %v42
    %v45 = vadd.f32 %v38, %v43
    %46 = vst [vmem:[#allocation5] sm:$0xff] %v45
    // Predicated region
    $region18: #{tpu_custom_call.1} parent=1 // pred_check
      _
    $region19: #{tpu_custom_call.1} parent=1 // pred_check_branch
      %48 = sbr.rel (0) target = $region21
    $region20: #{tpu_custom_call.1} parent=1 // pred_region
      %s50 = ssub.s32 128, 64
      %51 = vsyncadd [#allocation4], %s50
      %s52 = sshll.u32 [#allocation5], 4
      %s53 = int_to_ptr.vmem [resolvable:$true] %s52
      %58 = dma.vmem_to_hbm [thread:$0]  %s53, 64, %s3, [#allocation4], 64, 64, 4
    $region21: #{tpu_custom_call.1} parent=1 // pred_fallthru
      _
    // Predicated region
    $region22: #{tpu_custom_call.1} parent=1 // pred_check
      _
    $region23: #{tpu_custom_call.1} parent=1 // pred_check_branch
      %60 = sbr.rel (0) target = $region25
    $region24: #{tpu_custom_call.1} parent=1 // pred_region
      %61 = dma.done [#allocation4], 128
    $region25: #{tpu_custom_call.1} parent=1 // pred_fallthru
      _
    %62 = vsyncpa [#allocation3], 1
    %63 = vsyncpa [#allocation4], 1

</llo_original>
